<compile_context>
chip_gen: v6e
topology: v6e:2x2x1
jax: 0.10.0
libtpu: 0.0.40
codegen_flags: <defaults>
</compile_context>

<pallas_src>
import jax
import jax.numpy as jnp
from jax.experimental import pallas as pl
from jax.experimental.pallas import tpu as pltpu

_F32_BYTES = 4


# ----------------------------------------------------------------------------
# Kernel
# ----------------------------------------------------------------------------
def _ct_prenorm_kernel(x_ref, y_ref, g_ref, b_ref, *out_refs, eps, fused_fn):
    """Channel LayerNorm of x and y over axis 0 of the (C, TS) block.

    Matches torch:
        var  = torch.var(x, dim=1, unbiased=False, keepdim=True)
        mean = torch.mean(x, dim=1, keepdim=True)
        out  = (x - mean) / sqrt(var + eps) * g + b

    If `fused_fn` is not None, out = fused_fn(norm(x), norm(y)) is written to a
    single output ref (fn must be elementwise / shape preserving).
    """
    # Hoisted parameter load/cast, kept at (C, 1): implicit lane-broadcast in
    # the fused expression below (no (C, TS) temporaries, no vreg spill).
    gf = g_ref[...].astype(jnp.float32)          # (C, 1)
    bf = b_ref[...].astype(jnp.float32)          # (C, 1)

    def _norm(v_ref):
        v = v_ref[...].astype(jnp.float32)       # (C, TS)
        inv_c = 1.0 / v.shape[0]
        # Single sweep over v: shift by row 0 so the sum/sumsq cancellation is
        # O(var), not O(mean^2)  (review's one-pass moments, made robust).
        shifted = v - v[0:1, :]                  # (C, TS), row 0 == 0
        s1 = jnp.sum(shifted, axis=0, keepdims=True)            # (1, TS)
        s2 = jnp.sum(shifted * shifted, axis=0, keepdims=True)  # (1, TS)
        mshift = s1 * inv_c                                      # mean - v0
        var = jnp.maximum(s2 * inv_c - mshift * mshift, 0.0)     # biased var
        inv = jax.lax.rsqrt(var + eps)
        # (v - mean) == (shifted - mshift); gf/bf broadcast (C,1) -> (C,TS).
        return (shifted - mshift) * inv * gf + bf

    xn = _norm(x_ref)
    yn = _norm(y_ref)

    if fused_fn is None:
        out_refs[0][...] = xn.astype(out_refs[0].dtype)
        out_refs[1][...] = yn.astype(out_refs[1].dtype)
    else:
        out_refs[0][...] = fused_fn(xn, yn).astype(out_refs[0].dtype)


# ----------------------------------------------------------------------------
# Tiling helpers
# ----------------------------------------------------------------------------
def _vmem_capacity_bytes():
    try:
        return int(pltpu.get_tpu_info().vmem_capacity_bytes)
    except Exception:
        return 128 << 20  # conservative fallback (v5e/v6e physical VMEM)


def _vmem_budget_bytes():
    # Pipelined working-set budget: ~1/5 of physical VMEM, clamped to
    # [8 MiB, 24 MiB]  ->  24 MiB on 128-MiB parts (v5e/v6e), ~12.8 MiB on v7x.
    cap = _vmem_capacity_bytes()
    return int(min(24 << 20, max(8 << 20, cap // 5)))


def _per_lane_bytes(c_pad, itemsize):
    # Per lane-column of a (c_pad, TS) tile:
    #   double-buffered DMA tiles for 2 inputs + 2 outputs (true itemsize)
    #   + ~4 live f32 compute temporaries (v, shifted, product, out).
    return 2 * 4 * c_pad * itemsize + 4 * c_pad * _F32_BYTES


def _largest_divisor_tile(s_pad, cap):
    """Largest multiple of 128 that is <= cap and divides s_pad (s_pad is a
    multiple of 128, so 128 always qualifies -> never a masked remainder)."""
    cap = max(128, (cap // 128) * 128)
    for ts in range(cap, 127, -128):
        if s_pad % ts == 0:
            return ts
    return 128


def _pick_spatial_tile(s_pad, c_pad, itemsize, n_batch, budget_bytes):
    max_ts = max(128, (budget_bytes // _per_lane_bytes(c_pad, itemsize)) // 128 * 128)
    if s_pad <= max_ts:
        # Whole spatial axis fits one tile.  If B == 1 that would be a (1, 1)
        # grid; split so megacore (v7x, 2 TCs) has >= 2 parallel steps.
        if n_batch == 1 and s_pad >= 256:
            return _largest_divisor_tile(s_pad, s_pad // 2)
        return s_pad
    return _largest_divisor_tile(s_pad, max_ts)


# ----------------------------------------------------------------------------
# Wrappers
# ----------------------------------------------------------------------------
def _ct_norm_call(x, y, g, b, eps=1e-5, fused_fn=None, out_dtype=None):
    B, C, H, W = x.shape
    S = H * W
    s_pad = -(-S // 128) * 128            # lane-dense: pad spatial to 128-mult
    x3 = x.reshape(B, C, S)
    y3 = y.reshape(B, C, S)
    if s_pad != S:
        pad = ((0, 0), (0, 0), (0, s_pad - S))
        x3 = jnp.pad(x3, pad)
        y3 = jnp.pad(y3, pad)
    g3 = g.reshape(1, C, 1)
    b3 = b.reshape(1, C, 1)

    itemsize = jnp.dtype(x.dtype).itemsize          # true DMA itemsize
    c_pad = -(-C // 8) * 8                          # sublane padding of C
    ts = _pick_spatial_tile(s_pad, c_pad, itemsize, B, _vmem_budget_bytes())
    n_s = s_pad // ts                               # ts always divides s_pad

    per_step = _per_lane_bytes(c_pad, itemsize) * ts
    vmem_cap = _vmem_capacity_bytes()
    vmem_limit = int(min(vmem_cap // 2, max(32 << 20, per_step + (4 << 20))))

    xo_dtype = x.dtype if out_dtype is None else out_dtype
    yo_dtype = y.dtype if out_dtype is None else out_dtype

    tile_spec = pl.BlockSpec((None, C, ts), lambda i, j: (i, 0, j))
    # g/b: constant index map -> the resident block is reused across the grid
    # (no per-step re-DMA).  TODO(synk): pipeline_mode=pl.Buffered(1) would
    # also drop the redundant second buffer for these constant blocks.
    param_spec = pl.BlockSpec((None, C, 1), lambda i, j: (0, 0, 0))

    if fused_fn is None:
        out_shape = (jax.ShapeDtypeStruct((B, C, s_pad), xo_dtype),
                     jax.ShapeDtypeStruct((B, C, s_pad), yo_dtype))
        out_specs = [tile_spec, tile_spec]
    else:
        out_shape = jax.ShapeDtypeStruct((B, C, s_pad), xo_dtype)
        out_specs = tile_spec

    kernel = lambda *refs: _ct_prenorm_kernel(*refs, eps=eps, fused_fn=fused_fn)

    out = pl.pallas_call(
        kernel,
        out_shape=out_shape,
        grid_spec=pltpu.PrefetchScalarGridSpec(
            num_scalar_prefetch=0,
            grid=(B, n_s),
            in_specs=[tile_spec, tile_spec, param_spec, param_spec],
            out_specs=out_specs,
        ),
        compiler_params=pltpu.CompilerParams(
            dimension_semantics=("parallel", "parallel"),
            vmem_limit_bytes=vmem_limit,
        ),
    )(x3, y3, g3, b3)

    def _unpack(a):
        a = a[..., :S] if s_pad != S else a
        return a.reshape(B, C, H, W)

    if fused_fn is None:
        return _unpack(out[0]), _unpack(out[1])
    return _unpack(out)


def ct_layernorm_pair(x, y, g, b, eps=1e-5, out_dtype=None):
    """Apply the shared-parameter CT_LayerNorm to both x and y.

    x, y: [B, C, H, W] (NCHW, as in PyTorch); g, b: [1, C, 1, 1].
    """
    return _ct_norm_call(x, y, g, b, eps=eps, fused_fn=None, out_dtype=out_dtype)


def ct_prenorm(x, y, fn, g, b, eps=1e-5, fuse_elementwise=False, **kwargs):
    """CT_PreNorm.forward: x = norm(x); y = norm(y); return fn(x, y, **kwargs).

    If `fuse_elementwise=True` and fn is elementwise / shape-preserving, fn is
    applied inside the kernel epilogue so only one output stream hits HBM.
    """
    if fuse_elementwise:
        fused = (lambda a, c: fn(a, c, **kwargs)) if kwargs else fn
        return _ct_norm_call(x, y, g, b, eps=eps, fused_fn=fused)
    xn, yn = ct_layernorm_pair(x, y, g, b, eps=eps)
    # TODO(synk): for non-elementwise wrapped modules (attention blocks in
    # CSI_DMT) fn stays an external JAX callable; emit bf16 via out_dtype when
    # the downstream module tolerates it to cut write traffic further.
    return fn(xn, yn, **kwargs)


def _reference_ct_layernorm(x, g, b, eps=1e-5):
    """Plain-JAX reference matching torch CT_LayerNorm (biased variance)."""
    mean = jnp.mean(x, axis=1, keepdims=True)
    var = jnp.mean((x - mean) ** 2, axis=1, keepdims=True)
    return (x - mean) / jnp.sqrt(var + eps) * g + b


if __name__ == "__main__":
    key = jax.random.PRNGKey(0)
    kx, ky = jax.random.split(key)

    B, C, H, W = 2, 4, 16, 16
    x = jax.random.normal(kx, (B, C, H, W), dtype=jnp.float32)
    y = jax.random.normal(ky, (B, C, H, W), dtype=jnp.float32)

    # nn.Parameter(torch.ones / torch.zeros) init.
    g = jnp.ones((1, C, 1, 1), dtype=jnp.float32)
    b = jnp.zeros((1, C, 1, 1), dtype=jnp.float32)

    # Simple stand-in for the wrapped fn (e.g. an attention block in CSI_DMT).
    fn = lambda a, c: a + c

    # Module-faithful path: norm both inputs in one kernel, call fn outside.
    out = ct_prenorm(x, y, fn, g, b)
    out = jax.block_until_ready(out)
    ref = fn(_reference_ct_layernorm(x, g, b), _reference_ct_layernorm(y, g, b))
    assert out.shape == (B, C, H, W)
    assert jnp.max(jnp.abs(out - ref)) < 2e-5

    # Fused path: elementwise fn folded into the kernel epilogue.
    out_f = ct_prenorm(x, y, fn, g, b, fuse_elementwise=True)
    out_f = jax.block_until_ready(out_f)
    assert jnp.max(jnp.abs(out_f - ref)) < 2e-5

    # Non-128-multiple spatial size + B == 1: exercises lane padding and the
    # >=2-grid-step (megacore) split, with non-trivial g/b.
    B2, C2, H2, W2 = 1, 6, 12, 11           # S = 132 -> padded to 256
    x2 = jax.random.normal(kx, (B2, C2, H2, W2), dtype=jnp.float32)
    y2 = jax.random.normal(ky, (B2, C2, H2, W2), dtype=jnp.float32)
    g2 = 1.0 + 0.1 * jax.random.normal(key, (1, C2, 1, 1), dtype=jnp.float32)
    b2 = 0.1 * jax.random.normal(ky, (1, C2, 1, 1), dtype=jnp.float32)
    xn2, yn2 = ct_layernorm_pair(x2, y2, g2, b2)
    jax.block_until_ready((xn2, yn2))
    assert jnp.max(jnp.abs(xn2 - _reference_ct_layernorm(x2, g2, b2))) < 2e-5
    assert jnp.max(jnp.abs(yn2 - _reference_ct_layernorm(y2, g2, b2))) < 2e-5

    print("KERNEL_OK")
</pallas_src>

<mosaic_0001>
module attributes {stable_mosaic.version = 11 : i64} {
  func.func @_lambda_(%arg0: i32, %arg1: i32, %arg2: memref<1x4x256xf32, #tpu.memory_space<vmem>>, %arg3: memref<1x4x256xf32, #tpu.memory_space<vmem>>, %arg4: memref<1x4x1xf32, #tpu.memory_space<vmem>>, %arg5: memref<1x4x1xf32, #tpu.memory_space<vmem>>, %arg6: memref<1x4x256xf32, #tpu.memory_space<vmem>>, %arg7: memref<1x4x256xf32, #tpu.memory_space<vmem>>) attributes {dimension_semantics = [#tpu.dimension_semantics<parallel>, #tpu.dimension_semantics<parallel>], iteration_bounds = array<i64: 2, 1>, scalar_prefetch = 0 : i64, scratch_operands = 0 : i64, tpu.core_type = #tpu.core_type<tc>, window_params = [{transform_indices = @transform_0, window_bounds = array<i64: 1, 4, 256>}, {transform_indices = @transform_1, window_bounds = array<i64: 1, 4, 256>}, {pipeline_mode = #tpu.pipeline_mode<synchronous>, transform_indices = @transform_2, window_bounds = array<i64: 1, 4, 1>}, {pipeline_mode = #tpu.pipeline_mode<synchronous>, transform_indices = @transform_3, window_bounds = array<i64: 1, 4, 1>}, {transform_indices = @transform_4, window_bounds = array<i64: 1, 4, 256>}, {transform_indices = @transform_5, window_bounds = array<i64: 1, 4, 256>}]} {
    %c0 = arith.constant 0 : index
    %c0_0 = arith.constant 0 : index
    %c0_1 = arith.constant 0 : index
    %0 = vector.load %arg4[%c0, %c0_0, %c0_1] : memref<1x4x1xf32, #tpu.memory_space<vmem>>, vector<1x4x1xf32>
    %1 = vector.shape_cast %0 : vector<1x4x1xf32> to vector<4x1xf32>
    %c0_2 = arith.constant 0 : index
    %c0_3 = arith.constant 0 : index
    %c0_4 = arith.constant 0 : index
    %2 = vector.load %arg5[%c0_2, %c0_3, %c0_4] : memref<1x4x1xf32, #tpu.memory_space<vmem>>, vector<1x4x1xf32>
    %3 = vector.shape_cast %2 : vector<1x4x1xf32> to vector<4x1xf32>
    %c0_5 = arith.constant 0 : index
    %c0_6 = arith.constant 0 : index
    %c0_7 = arith.constant 0 : index
    %4 = vector.load %arg2[%c0_5, %c0_6, %c0_7] : memref<1x4x256xf32, #tpu.memory_space<vmem>>, vector<1x4x256xf32>
    %5 = vector.shape_cast %4 : vector<1x4x256xf32> to vector<4x256xf32>
    %6 = vector.extract_strided_slice %5 {offsets = [0, 0], sizes = [1, 256], strides = [1, 1]} : vector<4x256xf32> to vector<1x256xf32>
    %7 = vector.broadcast %6 : vector<1x256xf32> to vector<4x256xf32>
    %8 = arith.subf %5, %7 : vector<4x256xf32>
    %cst = arith.constant dense<0.000000e+00> : vector<256xf32>
    %9 = vector.multi_reduction <add>, %8, %cst [0] : vector<4x256xf32> to vector<256xf32>
    %10 = vector.shape_cast %9 : vector<256xf32> to vector<1x256xf32>
    %11 = arith.mulf %8, %8 : vector<4x256xf32>
    %cst_8 = arith.constant dense<0.000000e+00> : vector<256xf32>
    %12 = vector.multi_reduction <add>, %11, %cst_8 [0] : vector<4x256xf32> to vector<256xf32>
    %13 = vector.shape_cast %12 : vector<256xf32> to vector<1x256xf32>
    %cst_9 = arith.constant 2.500000e-01 : f32
    %14 = vector.broadcast %cst_9 : f32 to vector<1x256xf32>
    %15 = arith.mulf %10, %14 : vector<1x256xf32>
    %cst_10 = arith.constant 2.500000e-01 : f32
    %16 = vector.broadcast %cst_10 : f32 to vector<1x256xf32>
    %17 = arith.mulf %13, %16 : vector<1x256xf32>
    %18 = arith.mulf %15, %15 : vector<1x256xf32>
    %19 = arith.subf %17, %18 : vector<1x256xf32>
    %cst_11 = arith.constant 0.000000e+00 : f32
    %20 = vector.broadcast %cst_11 : f32 to vector<1x256xf32>
    %21 = arith.maximumf %19, %20 : vector<1x256xf32>
    %cst_12 = arith.constant 9.99999974E-6 : f32
    %22 = vector.broadcast %cst_12 : f32 to vector<1x256xf32>
    %23 = arith.addf %21, %22 : vector<1x256xf32>
    %24 = math.rsqrt %23 : vector<1x256xf32>
    %25 = vector.broadcast %15 : vector<1x256xf32> to vector<4x256xf32>
    %26 = arith.subf %8, %25 : vector<4x256xf32>
    %27 = vector.broadcast %24 : vector<1x256xf32> to vector<4x256xf32>
    %28 = arith.mulf %26, %27 : vector<4x256xf32>
    %29 = vector.broadcast %1 : vector<4x1xf32> to vector<4x256xf32>
    %30 = arith.mulf %28, %29 : vector<4x256xf32>
    %31 = vector.broadcast %3 : vector<4x1xf32> to vector<4x256xf32>
    %32 = arith.addf %30, %31 : vector<4x256xf32>
    %c0_13 = arith.constant 0 : index
    %c0_14 = arith.constant 0 : index
    %c0_15 = arith.constant 0 : index
    %33 = vector.load %arg3[%c0_13, %c0_14, %c0_15] : memref<1x4x256xf32, #tpu.memory_space<vmem>>, vector<1x4x256xf32>
    %34 = vector.shape_cast %33 : vector<1x4x256xf32> to vector<4x256xf32>
    %35 = vector.extract_strided_slice %34 {offsets = [0, 0], sizes = [1, 256], strides = [1, 1]} : vector<4x256xf32> to vector<1x256xf32>
    %36 = vector.broadcast %35 : vector<1x256xf32> to vector<4x256xf32>
    %37 = arith.subf %34, %36 : vector<4x256xf32>
    %cst_16 = arith.constant dense<0.000000e+00> : vector<256xf32>
    %38 = vector.multi_reduction <add>, %37, %cst_16 [0] : vector<4x256xf32> to vector<256xf32>
    %39 = vector.shape_cast %38 : vector<256xf32> to vector<1x256xf32>
    %40 = arith.mulf %37, %37 : vector<4x256xf32>
    %cst_17 = arith.constant dense<0.000000e+00> : vector<256xf32>
    %41 = vector.multi_reduction <add>, %40, %cst_17 [0] : vector<4x256xf32> to vector<256xf32>
    %42 = vector.shape_cast %41 : vector<256xf32> to vector<1x256xf32>
    %cst_18 = arith.constant 2.500000e-01 : f32
    %43 = vector.broadcast %cst_18 : f32 to vector<1x256xf32>
    %44 = arith.mulf %39, %43 : vector<1x256xf32>
    %cst_19 = arith.constant 2.500000e-01 : f32
    %45 = vector.broadcast %cst_19 : f32 to vector<1x256xf32>
    %46 = arith.mulf %42, %45 : vector<1x256xf32>
    %47 = arith.mulf %44, %44 : vector<1x256xf32>
    %48 = arith.subf %46, %47 : vector<1x256xf32>
    %cst_20 = arith.constant 0.000000e+00 : f32
    %49 = vector.broadcast %cst_20 : f32 to vector<1x256xf32>
    %50 = arith.maximumf %48, %49 : vector<1x256xf32>
    %cst_21 = arith.constant 9.99999974E-6 : f32
    %51 = vector.broadcast %cst_21 : f32 to vector<1x256xf32>
    %52 = arith.addf %50, %51 : vector<1x256xf32>
    %53 = math.rsqrt %52 : vector<1x256xf32>
    %54 = vector.broadcast %44 : vector<1x256xf32> to vector<4x256xf32>
    %55 = arith.subf %37, %54 : vector<4x256xf32>
    %56 = vector.broadcast %53 : vector<1x256xf32> to vector<4x256xf32>
    %57 = arith.mulf %55, %56 : vector<4x256xf32>
    %58 = vector.broadcast %1 : vector<4x1xf32> to vector<4x256xf32>
    %59 = arith.mulf %57, %58 : vector<4x256xf32>
    %60 = vector.broadcast %3 : vector<4x1xf32> to vector<4x256xf32>
    %61 = arith.addf %59, %60 : vector<4x256xf32>
    %c0_22 = arith.constant 0 : index
    %c0_23 = arith.constant 0 : index
    %c0_24 = arith.constant 0 : index
    %62 = vector.load %arg6[%c0_22, %c0_23, %c0_24] : memref<1x4x256xf32, #tpu.memory_space<vmem>>, vector<1x4x256xf32>
    %63 = vector.shape_cast %62 : vector<1x4x256xf32> to vector<4x256xf32>
    %64 = vector.shape_cast %32 : vector<4x256xf32> to vector<1x4x256xf32>
    tpu.vector_store %arg6[%c0_22, %c0_23, %c0_24], %64 {strides = array<i32>} : memref<1x4x256xf32, #tpu.memory_space<vmem>>, vector<1x4x256xf32>,
    %c0_25 = arith.constant 0 : index
    %c0_26 = arith.constant 0 : index
    %c0_27 = arith.constant 0 : index
    %65 = vector.load %arg7[%c0_25, %c0_26, %c0_27] : memref<1x4x256xf32, #tpu.memory_space<vmem>>, vector<1x4x256xf32>
    %66 = vector.shape_cast %65 : vector<1x4x256xf32> to vector<4x256xf32>
    %67 = vector.shape_cast %61 : vector<4x256xf32> to vector<1x4x256xf32>
    tpu.vector_store %arg7[%c0_25, %c0_26, %c0_27], %67 {strides = array<i32>} : memref<1x4x256xf32, #tpu.memory_space<vmem>>, vector<1x4x256xf32>,
    return
  }
  func.func @transform_0(%arg0: i32, %arg1: i32) -> (i32, i32, i32) {
    %c0_i32 = arith.constant 0 : i32
    %c0_i32_0 = arith.constant 0 : i32
    return %arg0, %c0_i32, %arg1 : i32, i32, i32
  }
  func.func @transform_1(%arg0: i32, %arg1: i32) -> (i32, i32, i32) {
    %c0_i32 = arith.constant 0 : i32
    %c0_i32_0 = arith.constant 0 : i32
    return %arg0, %c0_i32, %arg1 : i32, i32, i32
  }
  func.func @transform_2(%arg0: i32, %arg1: i32) -> (i32, i32, i32) {
    %c0_i32 = arith.constant 0 : i32
    %c0_i32_0 = arith.constant 0 : i32
    %c0_i32_1 = arith.constant 0 : i32
    %c0_i32_2 = arith.constant 0 : i32
    return %c0_i32, %c0_i32_0, %c0_i32_1 : i32, i32, i32
  }
  func.func @transform_3(%arg0: i32, %arg1: i32) -> (i32, i32, i32) {
    %c0_i32 = arith.constant 0 : i32
    %c0_i32_0 = arith.constant 0 : i32
    %c0_i32_1 = arith.constant 0 : i32
    %c0_i32_2 = arith.constant 0 : i32
    return %c0_i32, %c0_i32_0, %c0_i32_1 : i32, i32, i32
  }
  func.func @transform_4(%arg0: i32, %arg1: i32) -> (i32, i32, i32) {
    %c0_i32 = arith.constant 0 : i32
    %c0_i32_0 = arith.constant 0 : i32
    return %arg0, %c0_i32, %arg1 : i32, i32, i32
  }
  func.func @transform_5(%arg0: i32, %arg1: i32) -> (i32, i32, i32) {
    %c0_i32 = arith.constant 0 : i32
    %c0_i32_0 = arith.constant 0 : i32
    return %arg0, %c0_i32, %arg1 : i32, i32, i32
  }
}

</mosaic_0001>

<llo_original>
// kernel: tpu_custom_call.1
$region0: #{tpu_custom_call.1}
  #allocation0 [shape = 'u32[]', space=smem, size = 0x4, offset = 0x4, fixed_abs, tag = 'smem constant byte address 0x4 - core index']
  #allocation1 [shape = 'u32[144,128]{1,0:T(1,128)}', space=vmem, size = 0x12000, scoped, tag = 'internal scratch']
  %s0 = inlined_call_operand.hbm [shape: f32[2,4,256], index: 0, kind: input, shape index: {}]
  %s1 = inlined_call_operand.hbm [shape: f32[2,4,256], index: 1, kind: input, shape index: {}]
  %s2 = inlined_call_operand.vmem [shape: f32[1,4,1], index: 2, kind: input, shape index: {}]
  %s3 = inlined_call_operand.vmem [shape: f32[1,4,1], index: 3, kind: input, shape index: {}]
  %s4 = inlined_call_operand.hbm [shape: f32[2,4,256], index: 4, kind: output, shape index: {0}]
  %s5 = inlined_call_operand.hbm [shape: f32[2,4,256], index: 5, kind: output, shape index: {1}]
  %6 = xla_tuple %s4, %s5
  %s7 = sld [smem:[#allocation0]]
  $region65: #{tpu_custom_call.1} parent=0
    _
  %s9 = ssub.s32 1, %s7
  %s10 = scalar_select 0, %s9, %s7
  $region1: #{tpu_custom_call.1} parent=0
    #allocation2 [shape = 'u8[8192]{0}', space=vmem, size = 0x2000, scoped, tag = 'input window, operand 0']
    #allocation3 [shape = 's32[2]{0}', space=sflag, size = 0x8, scoped, tag = 'scoped memory for tpu_custom_call.1']
    #allocation4 [shape = 's32[2]{0}', space=sflag, size = 0x8, scoped, tag = 'scoped memory for tpu_custom_call.1']
    #allocation5 [shape = 'u8[8192]{0}', space=vmem, size = 0x2000, scoped, tag = 'input window, operand 1']
    #allocation6 [shape = 's32[2]{0}', space=sflag, size = 0x8, scoped, tag = 'scoped memory for tpu_custom_call.1']
    #allocation7 [shape = 'u8[8192]{0}', space=vmem, size = 0x2000, scoped, tag = 'output window, operand 0']
    #allocation8 [shape = 'u8[8192]{0}', space=vmem, size = 0x2000, scoped, tag = 'output window, operand 1']
    #allocation9 [shape = 's32[2]{0}', space=sflag, size = 0x8, scoped, tag = 'scoped memory for tpu_custom_call.1']
    %11 = vsyncpa [#allocation3], 0
    %s12 = scalar_lea.sflag [#allocation3], 1
    %13 = vsyncpa %s12, 0
    %14 = vsyncpa [#allocation6], 0
    %s15 = scalar_lea.sflag [#allocation6], 1
    %16 = vsyncpa %s15, 0
    %17 = vsyncpa [#allocation4], 0
    %s18 = scalar_lea.sflag [#allocation4], 1
    %19 = vsyncpa %s18, 0
    %20 = vsyncpa [#allocation9], 0
    %s21 = scalar_lea.sflag [#allocation9], 1
    %22 = vsyncpa %s21, 0
    loop: start=0, step=1, limit=4
    $region2: #{tpu_custom_call.1} parent=1 // loop_pre_header
      _
    $region3: #{tpu_custom_call.1} parent=1 // loop_header
      %s24 = sphi 0, %s28
      %p25 = scmp.ge.s32.totalorder %s24, 4
      %s31 = sphi 0, %s43
      %s32 = sphi 0, %s39
      %s33 = sphi 0, %s31
      %s34 = sphi 0, %s32
      %s35 = sphi 0, %s33
      %s36 = sphi 0, %s34
      %s48 = sphi 0, %s50
      %s51 = sphi 0, %s48
      %s52 = sphi 0, %s51
      %s68 = sphi 0, %s52
      %s76 = sphi 0, %s78
      %s79 = sphi 0, %s76
      %s80 = sphi 0, %s79
      %s96 = sphi 0, %s80
      %s100 = sphi 0, %s100
      %s102 = sphi 0, %s100
      %s103 = sphi 0, %s102
      %s117 = sphi 0, %s103
      %s121 = sphi 0, %s121
      %s123 = sphi 0, %s121
      %s124 = sphi 0, %s123
      %s138 = sphi 0, %s124
      %s146 = sphi 0, %s148
      %s149 = sphi 0, %s146
      %s150 = sphi 0, %s149
      %s166 = sphi 0, %s150
      %s174 = sphi 0, %s176
      %s177 = sphi 0, %s174
      %s178 = sphi 0, %s177
      %s194 = sphi 0, %s178
    $region4: #{tpu_custom_call.1} parent=1 // loop_header_branch
      %27 = sbr.rel (%p25) target = $region8
    $region5: #{tpu_custom_call.1} parent=1 // loop_body
      %s29 = ssub.s32 %s24, 1
      %s30 = ssub.s32 %s24, 2
      %s37 = sadd.s32 1, %s32
      %p38 = scmp.ge.s32.totalorder %s37, 1
      %s39 = scalar_select %p38, 0, %s37
      %s40 = sadd.s32 1, %s31
      %s41 = scalar_select %p38, %s40, %s31
      %p42 = scmp.ge.s32.totalorder %s41, 2
      %s43 = scalar_select %p42, 0, %s41
      %s44 = ssub.s32 %s31, %s43
      %s45 = ssub.s32 %s32, %s39
      %s46 = sor.u32 %s44, %s45
      %p47 = scmp.eq.s32.totalorder %s46, 0
      %s49 = sadd.s32 %s48, 1
      %s50 = scalar_select %p47, %s48, %s49
      %p53 = pneg %p47
      %p54 = scmp.eq.s32.totalorder %s24, 1
      %p55 = por %p53, %p54
      %p56 = scmp.ne.s32.totalorder %s48, %s51
      %p57 = scmp.eq.s32.totalorder %s24, 0
      %p58 = por %p56, %p57
      %p59 = scmp.ne.s32.totalorder %s48, %s51
      %p60 = scmp.eq.s32.totalorder %s29, 1
      %p61 = por %p59, %p60
      %p62 = scmp.ne.s32.totalorder %s51, %s52
      %p63 = scmp.eq.s32.totalorder %s29, 0
      %p64 = por %p62, %p63
      %p65 = scmp.ne.s32.totalorder %s51, %s52
      %p66 = scmp.eq.s32.totalorder %s30, 1
      %p67 = por %p65, %p66
      %p69 = scmp.ne.s32.totalorder %s52, %s68
      %p70 = scmp.eq.s32.totalorder %s30, 0
      %p71 = por %p69, %p70
      %s72 = ssub.s32 %s31, %s43
      %s73 = ssub.s32 %s32, %s39
      %s74 = sor.u32 %s72, %s73
      %p75 = scmp.eq.s32.totalorder %s74, 0
      %s77 = sadd.s32 %s76, 1
      %s78 = scalar_select %p75, %s76, %s77
      %p81 = pneg %p75
      %p82 = scmp.eq.s32.totalorder %s24, 1
      %p83 = por %p81, %p82
      %p84 = scmp.ne.s32.totalorder %s76, %s79
      %p85 = scmp.eq.s32.totalorder %s24, 0
      %p86 = por %p84, %p85
      %p87 = scmp.ne.s32.totalorder %s76, %s79
      %p88 = scmp.eq.s32.totalorder %s29, 1
      %p89 = por %p87, %p88
      %p90 = scmp.ne.s32.totalorder %s79, %s80
      %p91 = scmp.eq.s32.totalorder %s29, 0
      %p92 = por %p90, %p91
      %p93 = scmp.ne.s32.totalorder %s79, %s80
      %p94 = scmp.eq.s32.totalorder %s30, 1
      %p95 = por %p93, %p94
      %p97 = scmp.ne.s32.totalorder %s80, %s96
      %p98 = scmp.eq.s32.totalorder %s30, 0
      %p99 = por %p97, %p98
      %s101 = sadd.s32 %s100, 1
      %p104 = scmp.eq.s32.totalorder %s24, 1
      %p105 = scmp.ne.s32.totalorder %s100, %s102
      %p106 = scmp.eq.s32.totalorder %s24, 0
      %p107 = por %p105, %p106
      %p108 = scmp.ne.s32.totalorder %s100, %s102
      %p109 = scmp.eq.s32.totalorder %s29, 1
      %p110 = por %p108, %p109
      %p111 = scmp.ne.s32.totalorder %s102, %s103
      %p112 = scmp.eq.s32.totalorder %s29, 0
      %p113 = por %p111, %p112
      %p114 = scmp.ne.s32.totalorder %s102, %s103
      %p115 = scmp.eq.s32.totalorder %s30, 1
      %p116 = por %p114, %p115
      %p118 = scmp.ne.s32.totalorder %s103, %s117
      %p119 = scmp.eq.s32.totalorder %s30, 0
      %p120 = por %p118, %p119
      %s122 = sadd.s32 %s121, 1
      %p125 = scmp.eq.s32.totalorder %s24, 1
      %p126 = scmp.ne.s32.totalorder %s121, %s123
      %p127 = scmp.eq.s32.totalorder %s24, 0
      %p128 = por %p126, %p127
      %p129 = scmp.ne.s32.totalorder %s121, %s123
      %p130 = scmp.eq.s32.totalorder %s29, 1
      %p131 = por %p129, %p130
      %p132 = scmp.ne.s32.totalorder %s123, %s124
      %p133 = scmp.eq.s32.totalorder %s29, 0
      %p134 = por %p132, %p133
      %p135 = scmp.ne.s32.totalorder %s123, %s124
      %p136 = scmp.eq.s32.totalorder %s30, 1
      %p137 = por %p135, %p136
      %p139 = scmp.ne.s32.totalorder %s124, %s138
      %p140 = scmp.eq.s32.totalorder %s30, 0
      %p141 = por %p139, %p140
      %s142 = ssub.s32 %s31, %s43
      %s143 = ssub.s32 %s32, %s39
      %s144 = sor.u32 %s142, %s143
      %p145 = scmp.eq.s32.totalorder %s144, 0
      %s147 = sadd.s32 %s146, 1
      %s148 = scalar_select %p145, %s146, %s147
      %p151 = pneg %p145
      %p152 = scmp.eq.s32.totalorder %s24, 1
      %p153 = por %p151, %p152
      %p154 = scmp.ne.s32.totalorder %s146, %s149
      %p155 = scmp.eq.s32.totalorder %s24, 0
      %p156 = por %p154, %p155
      %p157 = scmp.ne.s32.totalorder %s146, %s149
      %p158 = scmp.eq.s32.totalorder %s29, 1
      %p159 = por %p157, %p158
      %p160 = scmp.ne.s32.totalorder %s149, %s150
      %p161 = scmp.eq.s32.totalorder %s29, 0
      %p162 = por %p160, %p161
      %p163 = scmp.ne.s32.totalorder %s149, %s150
      %p164 = scmp.eq.s32.totalorder %s30, 1
      %p165 = por %p163, %p164
      %p167 = scmp.ne.s32.totalorder %s150, %s166
      %p168 = scmp.eq.s32.totalorder %s30, 0
      %p169 = por %p167, %p168
      %s170 = ssub.s32 %s31, %s43
      %s171 = ssub.s32 %s32, %s39
      %s172 = sor.u32 %s170, %s171
      %p173 = scmp.eq.s32.totalorder %s172, 0
      %s175 = sadd.s32 %s174, 1
      %s176 = scalar_select %p173, %s174, %s175
      %p179 = pneg %p173
      %p180 = scmp.eq.s32.totalorder %s24, 1
      %p181 = por %p179, %p180
      %p182 = scmp.ne.s32.totalorder %s174, %s177
      %p183 = scmp.eq.s32.totalorder %s24, 0
      %p184 = por %p182, %p183
      %p185 = scmp.ne.s32.totalorder %s174, %s177
      %p186 = scmp.eq.s32.totalorder %s29, 1
      %p187 = por %p185, %p186
      %p188 = scmp.ne.s32.totalorder %s177, %s178
      %p189 = scmp.eq.s32.totalorder %s29, 0
      %p190 = por %p188, %p189
      %p191 = scmp.ne.s32.totalorder %s177, %s178
      %p192 = scmp.eq.s32.totalorder %s30, 1
      %p193 = por %p191, %p192
      %p195 = scmp.ne.s32.totalorder %s178, %s194
      %p196 = scmp.eq.s32.totalorder %s30, 0
      %p197 = por %p195, %p196
      %p198 = scmp.le.s32.totalorder 1, %s24
      %p199 = scmp.lt.s32.totalorder %s24, 3
      %p200 = pnand %p198, %p199
      %p201 = pneg %p200
      // Predicated region
      $region9: #{tpu_custom_call.1} parent=5 // pred_check
        _
      $region10: #{tpu_custom_call.1} parent=5 // pred_check_branch
        %203 = sbr.rel (%p200) target = $region12
      $region11: #{tpu_custom_call.1} parent=5 // pred_region
        %s204 = ssub.s32 %s24, 1
        // Predicated region
        $region13: #{tpu_custom_call.1} parent=11 // pred_check
          %p205 = pneg %p113
        $region14: #{tpu_custom_call.1} parent=11 // pred_check_branch
          %207 = sbr.rel (%p205) target = $region16
        $region15: #{tpu_custom_call.1} parent=11 // pred_region
          _
        $region16: #{tpu_custom_call.1} parent=11 // pred_fallthru
          _
        // Predicated region
        $region17: #{tpu_custom_call.1} parent=11 // pred_check
          %p208 = pneg %p134
        $region18: #{tpu_custom_call.1} parent=11 // pred_check_branch
          %210 = sbr.rel (%p208) target = $region20
        $region19: #{tpu_custom_call.1} parent=11 // pred_region
          _
        $region20: #{tpu_custom_call.1} parent=11 // pred_fallthru
          _
      $region12: #{tpu_custom_call.1} parent=5 // pred_fallthru
        _
      %p211 = scmp.lt.s32.totalorder %s24, 2
      // Predicated region
      $region21: #{tpu_custom_call.1} parent=5 // pred_check
        %p212 = pneg %p211
      $region22: #{tpu_custom_call.1} parent=5 // pred_check_branch
        %214 = sbr.rel (%p212) target = $region24
      $region23: #{tpu_custom_call.1} parent=5 // pred_region
        // Predicated region
        $region25: #{tpu_custom_call.1} parent=23 // pred_check
          %p215 = pneg %p58
        $region26: #{tpu_custom_call.1} parent=23 // pred_check_branch
          %217 = sbr.rel (%p215) target = $region28
        $region27: #{tpu_custom_call.1} parent=23 // pred_region
          %s218 = sand.u32 %s48, 1
          %s219 = scalar_lea.sflag [#allocation3], %s218
          %s220 = sand.u32 %s48, 1
          %s221 = smul.addr %s220, 8
          %s222 = scalar_lea.vmem [#allocation2], %s221
          %s223 = smul.u32 2, %s32
          %s225 = ssub.s32 128, 128
          %226 = vsyncadd %s219, %s225
          %s227 = smul.addr %s31, 2
          %s228 = sadd.s32 %s223, %s227
          %s229 = smul.addr %s228, 64
          %s230 = scalar_lea.hbm %s0, %s229
          %s232 = sshll.u32 %s222, 4
          %s233 = int_to_ptr.vmem [resolvable:$true] %s232
          %235 = dma.hbm_to_vmem [thread:$0]  %s230, 128, %s233, %s219
        $region28: #{tpu_custom_call.1} parent=23 // pred_fallthru
          _
        // Predicated region
        $region29: #{tpu_custom_call.1} parent=23 // pred_check
          %p236 = pneg %p86
        $region30: #{tpu_custom_call.1} parent=23 // pred_check_branch
          %238 = sbr.rel (%p236) target = $region32
        $region31: #{tpu_custom_call.1} parent=23 // pred_region
          %s239 = sand.u32 %s76, 1
          %s240 = scalar_lea.sflag [#allocation6], %s239
          %s241 = sand.u32 %s76, 1
          %s242 = smul.addr %s241, 8
          %s243 = scalar_lea.vmem [#allocation5], %s242
          %s244 = smul.u32 2, %s32
          %s246 = ssub.s32 128, 128
          %247 = vsyncadd %s240, %s246
          %s248 = smul.addr %s31, 2
          %s249 = sadd.s32 %s244, %s248
          %s250 = smul.addr %s249, 64
          %s251 = scalar_lea.hbm %s1, %s250
          %s253 = sshll.u32 %s243, 4
          %s254 = int_to_ptr.vmem [resolvable:$true] %s253
          %256 = dma.hbm_to_vmem [thread:$0]  %s251, 128, %s254, %s240
        $region32: #{tpu_custom_call.1} parent=23 // pred_fallthru
          _
      $region24: #{tpu_custom_call.1} parent=5 // pred_fallthru
        _
      %p257 = scmp.le.s32.totalorder 1, %s24
      %p258 = scmp.lt.s32.totalorder %s24, 3
      %p259 = pnand %p257, %p258
      %p260 = pneg %p259
      // Predicated region
      $region33: #{tpu_custom_call.1} parent=5 // pred_check
        _
      $region34: #{tpu_custom_call.1} parent=5 // pred_check_branch
        %262 = sbr.rel (%p259) target = $region36
      $region35: #{tpu_custom_call.1} parent=5 // pred_region
        %s263 = ssub.s32 %s24, 1
        %s264 = sand.u32 %s51, 1
        %s265 = scalar_lea.sflag [#allocation3], %s264
        %s266 = sand.u32 %s51, 1
        %s267 = smul.addr %s266, 8
        %s268 = scalar_lea.vmem [#allocation2], %s267
        // Predicated region
        $region37: #{tpu_custom_call.1} parent=35 // pred_check
          %p269 = pneg %p64
        $region38: #{tpu_custom_call.1} parent=35 // pred_check_branch
          %271 = sbr.rel (%p269) target = $region40
        $region39: #{tpu_custom_call.1} parent=35 // pred_region
          %272 = dma.done %s265, 128
        $region40: #{tpu_custom_call.1} parent=35 // pred_fallthru
          _
        %s273 = sand.u32 %s79, 1
        %s274 = scalar_lea.sflag [#allocation6], %s273
        %s275 = sand.u32 %s79, 1
        %s276 = smul.addr %s275, 8
        %s277 = scalar_lea.vmem [#allocation5], %s276
        // Predicated region
        $region41: #{tpu_custom_call.1} parent=35 // pred_check
          %p278 = pneg %p92
        $region42: #{tpu_custom_call.1} parent=35 // pred_check_branch
          %280 = sbr.rel (%p278) target = $region44
        $region43: #{tpu_custom_call.1} parent=35 // pred_region
          %281 = dma.done %s274, 128
        $region44: #{tpu_custom_call.1} parent=35 // pred_fallthru
          _
        %s282 = sand.u32 %s51, 1
        %s283 = scalar_lea.sflag [#allocation3], %s282
        %s284 = sand.u32 %s51, 1
        %s285 = smul.addr %s284, 8
        %s286 = scalar_lea.vmem [#allocation2], %s285
        %p287 = pneg %p64
        %p288 = pneg %p61
        %s289 = sand.u32 %s79, 1
        %s290 = scalar_lea.sflag [#allocation6], %s289
        %s291 = sand.u32 %s79, 1
        %s292 = smul.addr %s291, 8
        %s293 = scalar_lea.vmem [#allocation5], %s292
        %p294 = pneg %p92
        %p295 = pneg %p89
        %p296 = pneg %p113
        %p297 = pneg %p110
        %p298 = pneg %p134
        %p299 = pneg %p131
        %p300 = pneg %p162
        %p301 = pneg %p159
        %s302 = sand.u32 %s149, 1
        %s303 = scalar_lea.sflag [#allocation4], %s302
        %s304 = sand.u32 %s149, 1
        %s305 = smul.addr %s304, 8
        %s306 = scalar_lea.vmem [#allocation7], %s305
        %p307 = pneg %p190
        %p308 = pneg %p187
        %s309 = sand.u32 %s177, 1
        %s310 = scalar_lea.sflag [#allocation9], %s309
        %s311 = sand.u32 %s177, 1
        %s312 = smul.addr %s311, 8
        %s313 = scalar_lea.vmem [#allocation8], %s312
        %s314 = smul.u32 2, %s34
        %s315 = smul.u32 2, %s34
        %s316 = smul.u32 2, %s34
        %s317 = smul.u32 2, %s34
        %v318 = vld [vmem:[%s2] sm:$0xf]
        %v319 = vld [vmem:[%s3] sm:$0xf]
        %v320 = vld [vmem:[%s268] sm:$0xff]
        %v322 = vlaneseq
        %v323 = vshrl.u32 %v322, 7
        %v324 = vsub.s32 0, %v323
        %v325 = vrot.slane %v320, %v324
        %v326 = vlaneseq
        %v327 = vshrl.u32 %v326, 7
        %v328 = vsub.s32 4, %v327
        %v329 = vrot.slane %v320, %v328
        %v332 = vlaneseq
        %v333 = vshrl.u32 %v332, 7
        %v334 = vsub.s32 0, %v333
        %v335 = vrot.slane %v325, %v334
        %v336 = vlaneseq
        %v337 = vshrl.u32 %v336, 7
        %v338 = vsub.s32 0, %v337
        %v339 = vrot.slane %v329, %v338
        %v342 = vcombine.low %v335, %v339
        %v344 = vsub.f32 %v320, %v342
        %v346 = vcombine.high %v344, %v344
        %vm348 = vcmask 1043456
        %v349 = vsel %vm348, %v344, 0.0
        %v350 = vrot.slane %v349, 4
        %v351 = vadd.f32 %v349, %v350
        %v352 = vrot.slane %v351, 2
        %v353 = vadd.f32 %v351, %v352
        %v354 = vrot.slane %v353, 1
        %v355 = vadd.f32 %v353, %v354
        %v356 = vsel %vm348, %v346, 0.0
        %v357 = vrot.slane %v356, 4
        %v358 = vadd.f32 %v356, %v357
        %v359 = vrot.slane %v358, 2
        %v360 = vadd.f32 %v358, %v359
        %v361 = vrot.slane %v360, 1
        %v362 = vadd.f32 %v360, %v361
        %v363 = vmul.f32 %v344, %v344
        %v365 = vcombine.high %v363, %v363
        %v367 = vsel %vm348, %v363, 0.0
        %v368 = vrot.slane %v367, 4
        %v369 = vadd.f32 %v367, %v368
        %v370 = vrot.slane %v369, 2
        %v371 = vadd.f32 %v369, %v370
        %v372 = vrot.slane %v371, 1
        %v373 = vadd.f32 %v371, %v372
        %v374 = vsel %vm348, %v365, 0.0
        %v375 = vrot.slane %v374, 4
        %v376 = vadd.f32 %v374, %v375
        %v377 = vrot.slane %v376, 2
        %v378 = vadd.f32 %v376, %v377
        %v379 = vrot.slane %v378, 1
        %v380 = vadd.f32 %v378, %v379
        %v381 = vmul.f32 %v355, 0.25
        %v382 = vmul.f32 %v362, 0.25
        %v383 = vmul.f32 %v373, 0.25
        %v384 = vmul.f32 %v380, 0.25
        %v385 = vmul.f32 %v381, %v381
        %v386 = vmul.f32 %v382, %v382
        %v387 = vsub.f32 %v383, %v385
        %v388 = vsub.f32 %v384, %v386
        %v389 = vmax.f32 %v387, 0.0
        %v390 = vmax.f32 %v388, 0.0
        %v391 = vadd.f32 %v389, 1e-05
        %v392 = vadd.f32 %v390, 1e-05
        %v393 = vrsqrt.pop %v391
        %v394 = vrsqrt.pop %v392
        %v397 = vcombine.low %v381, %v382
        %v399 = vsub.f32 %v344, %v397
        %v402 = vcombine.low %v393, %v394
        %v404 = vmul.f32 %v399, %v402
        %406 = vset.pattern.permute.xlu0 0
        %407 = vperm.xlu0 %406, %v318
        %v408 = vpop.permute.xlu0 %407
        %v410 = vunpack.c.l.s4 839922192
        %v411 = vunpack.c.0.s8 %v410
        %v412 = vlaneseq
        %v413 = vshrl.u32 %v412, 7
        %v414 = vsub.s32 %v411, %v413
        %v415 = vrot.slane %v408, %v414
        %v417 = vmul.f32 %v404, %v415
        %419 = vset.pattern.permute.xlu0 0
        %420 = vperm.xlu0 %419, %v319
        %v421 = vpop.permute.xlu0 %420
        %v423 = vunpack.c.l.s4 839922192
        %v424 = vunpack.c.0.s8 %v423
        %v425 = vlaneseq
        %v426 = vshrl.u32 %v425, 7
        %v427 = vsub.s32 %v424, %v426
        %v428 = vrot.slane %v421, %v427
        %v430 = vadd.f32 %v417, %v428
        %v431 = vld [vmem:[%s277] sm:$0xff]
        %v433 = vlaneseq
        %v434 = vshrl.u32 %v433, 7
        %v435 = vsub.s32 0, %v434
        %v436 = vrot.slane %v431, %v435
        %v437 = vlaneseq
        %v438 = vshrl.u32 %v437, 7
        %v439 = vsub.s32 4, %v438
        %v440 = vrot.slane %v431, %v439
        %v443 = vlaneseq
        %v444 = vshrl.u32 %v443, 7
        %v445 = vsub.s32 0, %v444
        %v446 = vrot.slane %v436, %v445
        %v447 = vlaneseq
        %v448 = vshrl.u32 %v447, 7
        %v449 = vsub.s32 0, %v448
        %v450 = vrot.slane %v440, %v449
        %v453 = vcombine.low %v446, %v450
        %v455 = vsub.f32 %v431, %v453
        %v457 = vcombine.high %v455, %v455
        %v459 = vsel %vm348, %v455, 0.0
        %v460 = vrot.slane %v459, 4
        %v461 = vadd.f32 %v459, %v460
        %v462 = vrot.slane %v461, 2
        %v463 = vadd.f32 %v461, %v462
        %v464 = vrot.slane %v463, 1
        %v465 = vadd.f32 %v463, %v464
        %v466 = vsel %vm348, %v457, 0.0
        %v467 = vrot.slane %v466, 4
        %v468 = vadd.f32 %v466, %v467
        %v469 = vrot.slane %v468, 2
        %v470 = vadd.f32 %v468, %v469
        %v471 = vrot.slane %v470, 1
        %v472 = vadd.f32 %v470, %v471
        %v473 = vmul.f32 %v455, %v455
        %v475 = vcombine.high %v473, %v473
        %v477 = vsel %vm348, %v473, 0.0
        %v478 = vrot.slane %v477, 4
        %v479 = vadd.f32 %v477, %v478
        %v480 = vrot.slane %v479, 2
        %v481 = vadd.f32 %v479, %v480
        %v482 = vrot.slane %v481, 1
        %v483 = vadd.f32 %v481, %v482
        %v484 = vsel %vm348, %v475, 0.0
        %v485 = vrot.slane %v484, 4
        %v486 = vadd.f32 %v484, %v485
        %v487 = vrot.slane %v486, 2
        %v488 = vadd.f32 %v486, %v487
        %v489 = vrot.slane %v488, 1
        %v490 = vadd.f32 %v488, %v489
        %v491 = vmul.f32 %v465, 0.25
        %v492 = vmul.f32 %v472, 0.25
        %v493 = vmul.f32 %v483, 0.25
        %v494 = vmul.f32 %v490, 0.25
        %v495 = vmul.f32 %v491, %v491
        %v496 = vmul.f32 %v492, %v492
        %v497 = vsub.f32 %v493, %v495
        %v498 = vsub.f32 %v494, %v496
        %v499 = vmax.f32 %v497, 0.0
        %v500 = vmax.f32 %v498, 0.0
        %v501 = vadd.f32 %v499, 1e-05
        %v502 = vadd.f32 %v500, 1e-05
        %v503 = vrsqrt.pop %v501
        %v504 = vrsqrt.pop %v502
        %v507 = vcombine.low %v491, %v492
        %v509 = vsub.f32 %v455, %v507
        %v512 = vcombine.low %v503, %v504
        %v514 = vmul.f32 %v509, %v512
        %v515 = vmul.f32 %v514, %v415
        %v516 = vadd.f32 %v515, %v428
        %517 = vst [vmem:[%s306] sm:$0xff] %v430
        %518 = vst [vmem:[%s313] sm:$0xff] %v516
        %s519 = sand.u32 %s149, 1
        %s520 = scalar_lea.sflag [#allocation4], %s519
        %s521 = sand.u32 %s149, 1
        %s522 = smul.addr %s521, 8
        %s523 = scalar_lea.vmem [#allocation7], %s522
        %s524 = sand.u32 %s177, 1
        %s525 = scalar_lea.sflag [#allocation9], %s524
        %s526 = sand.u32 %s177, 1
        %s527 = smul.addr %s526, 8
        %s528 = scalar_lea.vmem [#allocation8], %s527
        // Predicated region
        $region45: #{tpu_custom_call.1} parent=35 // pred_check
          %p529 = pneg %p159
        $region46: #{tpu_custom_call.1} parent=35 // pred_check_branch
          %531 = sbr.rel (%p529) target = $region48
        $region47: #{tpu_custom_call.1} parent=35 // pred_region
          %s532 = smul.u32 2, %s34
          %s534 = ssub.s32 128, 128
          %535 = vsyncadd %s520, %s534
          %s536 = smul.addr %s33, 2
          %s537 = sadd.s32 %s532, %s536
          %s538 = smul.addr %s537, 64
          %s539 = scalar_lea.hbm %s4, %s538
          %s541 = sshll.u32 %s523, 4
          %s542 = int_to_ptr.vmem [resolvable:$true] %s541
          %544 = dma.vmem_to_hbm [thread:$0]  %s542, 128, %s539, %s520
        $region48: #{tpu_custom_call.1} parent=35 // pred_fallthru
          _
        // Predicated region
        $region49: #{tpu_custom_call.1} parent=35 // pred_check
          %p545 = pneg %p187
        $region50: #{tpu_custom_call.1} parent=35 // pred_check_branch
          %547 = sbr.rel (%p545) target = $region52
        $region51: #{tpu_custom_call.1} parent=35 // pred_region
          %s548 = smul.u32 2, %s34
          %s550 = ssub.s32 128, 128
          %551 = vsyncadd %s525, %s550
          %s552 = smul.addr %s33, 2
          %s553 = sadd.s32 %s548, %s552
          %s554 = smul.addr %s553, 64
          %s555 = scalar_lea.hbm %s5, %s554
          %s557 = sshll.u32 %s528, 4
          %s558 = int_to_ptr.vmem [resolvable:$true] %s557
          %560 = dma.vmem_to_hbm [thread:$0]  %s558, 128, %s555, %s525
        $region52: #{tpu_custom_call.1} parent=35 // pred_fallthru
          _
      $region36: #{tpu_custom_call.1} parent=5 // pred_fallthru
        _
      %p561 = scmp.le.s32.totalorder 2, %s24
      // Predicated region
      $region53: #{tpu_custom_call.1} parent=5 // pred_check
        %p562 = pneg %p561
      $region54: #{tpu_custom_call.1} parent=5 // pred_check_branch
        %564 = sbr.rel (%p562) target = $region56
      $region55: #{tpu_custom_call.1} parent=5 // pred_region
        %s565 = ssub.s32 %s24, 2
        // Predicated region
        $region57: #{tpu_custom_call.1} parent=55 // pred_check
          %p566 = pneg %p165
        $region58: #{tpu_custom_call.1} parent=55 // pred_check_branch
          %568 = sbr.rel (%p566) target = $region60
        $region59: #{tpu_custom_call.1} parent=55 // pred_region
          %s569 = sand.u32 %s150, 1
          %s570 = scalar_lea.sflag [#allocation4], %s569
          %s571 = sand.u32 %s150, 1
          %s572 = smul.addr %s571, 8
          %s573 = scalar_lea.vmem [#allocation7], %s572
          %574 = dma.done %s570, 128
        $region60: #{tpu_custom_call.1} parent=55 // pred_fallthru
          _
        // Predicated region
        $region61: #{tpu_custom_call.1} parent=55 // pred_check
          %p575 = pneg %p193
        $region62: #{tpu_custom_call.1} parent=55 // pred_check_branch
          %577 = sbr.rel (%p575) target = $region64
        $region63: #{tpu_custom_call.1} parent=55 // pred_region
          %s578 = sand.u32 %s178, 1
          %s579 = scalar_lea.sflag [#allocation9], %s578
          %s580 = sand.u32 %s178, 1
          %s581 = smul.addr %s580, 8
          %s582 = scalar_lea.vmem [#allocation8], %s581
          %583 = dma.done %s579, 128
        $region64: #{tpu_custom_call.1} parent=55 // pred_fallthru
          _
      $region56: #{tpu_custom_call.1} parent=5 // pred_fallthru
        _
    $region6: #{tpu_custom_call.1} parent=1 // loop_footer
      %s28 = sadd.s32 1, %s24
    $region7: #{tpu_custom_call.1} parent=1 // loop_footer_branch
      %23 = sbr.rel target = $region3
    $region8: #{tpu_custom_call.1} parent=1 // loop_exit
      _
    %584 = vsyncpa [#allocation3], 1
    %s585 = scalar_lea.sflag [#allocation3], 1
    %586 = vsyncpa %s585, 1
    %587 = vsyncpa [#allocation6], 1
    %s588 = scalar_lea.sflag [#allocation6], 1
    %589 = vsyncpa %s588, 1
    %590 = vsyncpa [#allocation4], 1
    %s591 = scalar_lea.sflag [#allocation4], 1
    %592 = vsyncpa %s591, 1
    %593 = vsyncpa [#allocation9], 1
    %s594 = scalar_lea.sflag [#allocation9], 1
    %595 = vsyncpa %s594, 1

</llo_original>
